<compile_context>
chip_gen: v5e
topology: v5e:2x2
jax: 0.10.0
libtpu: 0.0.40
codegen_flags: <defaults>
</compile_context>

<pallas_src>
import jax
import jax.numpy as jnp
from jax import lax
from jax.experimental import pallas as pl

# Problem sizes (consistent with the module; in_channels bumped 3 -> 4, batch 2).
N, C, H, W = 2, 4, 32, 32
KH, KW = 5, 5
STRIDE, PAD, DIL = 2, 4, 4
OH = (H + 2 * PAD - DIL * (KH - 1) - 1) // STRIDE + 1   # 12
OW = (W + 2 * PAD - DIL * (KW - 1) - 1) // STRIDE + 1   # 12
OHW = OH * OW                                           # 144
OHW_PAD = 256                                           # 2 x 128 lanes -> unmasked stores
NTAP = KH * KW                                          # 25
NC = N * C                                              # 8 = full sublane occupancy


def depthwise_conv_kernel(x_ref, w_ref, b_ref, o_ref):
    # x_ref: (NTAP, NC, OHW_PAD)  im2col taps, batch folded onto sublanes, lane-padded
    # w_ref: (NTAP, NC, OHW_PAD)  depthwise weights pre-broadcast along lanes
    # b_ref: (NC, OHW_PAD)        bias - 1 (the "- 1" epilogue folded in), pre-broadcast
    # o_ref: (NC, OHW_PAD)        lane-dense output tile
    acc = x_ref[0] * w_ref[0] + b_ref[...]        # bias & "-1" folded into the init
    for k in range(1, NTAP):                      # 24 more unrolled full-vreg VPU FMAs
        acc = acc + x_ref[k] * w_ref[k]
    o_ref[...] = acc


@jax.jit
def model_forward(x, w, b):
    n = x.shape[0]
    nc = n * C
    x = x.astype(jnp.float32)

    # ---- glue (fused under this jit): zero-pad + gather-based im2col ----------------
    x_pad = jnp.pad(x, ((0, 0), (0, 0), (PAD, PAD), (PAD, PAD)))
    row_idx = (jnp.arange(KH) * DIL)[:, None] + (jnp.arange(OH) * STRIDE)[None, :]  # (KH, OH)
    col_idx = (jnp.arange(KW) * DIL)[:, None] + (jnp.arange(OW) * STRIDE)[None, :]  # (KW, OW)
    xr = x_pad[:, :, row_idx, :]                  # (n, C, KH, OH, W + 2*PAD)
    xt = xr[:, :, :, :, col_idx]                  # (n, C, KH, OH, KW, OW)
    x_taps = xt.transpose(2, 4, 0, 1, 3, 5).reshape(NTAP, nc, OHW)     # (25, n*C, 144)
    x_taps = jnp.pad(x_taps, ((0, 0), (0, 0), (0, OHW_PAD - OHW)))     # (25, n*C, 256)

    # Weights: (C, KH, KW) -> per-tap (NTAP, C) -> batch-tiled -> lane-broadcast.
    w_tc = w.reshape(C, NTAP).T.astype(jnp.float32)                              # (25, C)
    w_nc = jnp.broadcast_to(w_tc[:, None, :], (NTAP, n, C)).reshape(NTAP, nc)    # (25, n*C)
    w_taps = jnp.broadcast_to(w_nc[:, :, None], (NTAP, nc, OHW_PAD))             # (25, n*C, 256)

    # bias - 1, batch-tiled and lane-broadcast.
    b_nc = jnp.broadcast_to((b - 1.0).astype(jnp.float32)[None, :], (n, C)).reshape(nc)
    b_m1 = jnp.broadcast_to(b_nc[:, None], (nc, OHW_PAD))                        # (n*C, 256)

    # Single kernel invocation: whole arrays live in VMEM (~0.4 MB total), no grid.
    out = pl.pallas_call(
        depthwise_conv_kernel,
        out_shape=jax.ShapeDtypeStruct((nc, OHW_PAD), jnp.float32),
    )(x_taps, w_taps, b_m1)

    return out[:, :OHW].reshape(n, C, OH, OW)


if __name__ == "__main__":
    key = jax.random.PRNGKey(0)
    kx, kw_, kb = jax.random.split(key, 3)

    x = jax.random.normal(kx, (N, C, H, W), dtype=jnp.float32)
    # Deterministic parameter init (per-channel 5x5 depthwise filters + bias).
    w = jax.random.normal(kw_, (C, KH, KW), dtype=jnp.float32) * 0.1
    b = jax.random.normal(kb, (C,), dtype=jnp.float32) * 0.1

    out = jax.block_until_ready(model_forward(x, w, b))
    assert out.shape == (N, C, OH, OW), out.shape

    # Reference: XLA's grouped (depthwise) dilated conv, then +bias, -1.
    ref = lax.conv_general_dilated(
        x, w.reshape(C, 1, KH, KW),
        window_strides=(STRIDE, STRIDE),
        padding=((PAD, PAD), (PAD, PAD)),
        rhs_dilation=(DIL, DIL),
        dimension_numbers=("NCHW", "OIHW", "NCHW"),
        feature_group_count=C,
    ) + b[None, :, None, None] - 1.0

    assert jnp.allclose(out, ref, atol=1e-4, rtol=1e-4), (
        float(jnp.max(jnp.abs(out - ref))))
    print("KERNEL_OK")
</pallas_src>

<mosaic_0001>
module attributes {stable_mosaic.version = 11 : i64} {
  func.func @depthwise_conv_kernel(%arg0: memref<25x8x256xf32, #tpu.memory_space<vmem>>, %arg1: memref<25x8x256xf32, #tpu.memory_space<vmem>>, %arg2: memref<8x256xf32, #tpu.memory_space<vmem>>, %arg3: memref<8x256xf32, #tpu.memory_space<vmem>>) attributes {dimension_semantics = [], scalar_prefetch = 0 : i64, scratch_operands = 0 : i64, tpu.core_type = #tpu.core_type<tc>} {
    %c0 = arith.constant 0 : index
    %c0_0 = arith.constant 0 : index
    %c0_1 = arith.constant 0 : index
    %0 = vector.load %arg0[%c0, %c0_0, %c0_1] : memref<25x8x256xf32, #tpu.memory_space<vmem>>, vector<1x8x256xf32>
    %1 = vector.shape_cast %0 : vector<1x8x256xf32> to vector<8x256xf32>
    %c0_2 = arith.constant 0 : index
    %c0_3 = arith.constant 0 : index
    %c0_4 = arith.constant 0 : index
    %2 = vector.load %arg1[%c0_2, %c0_3, %c0_4] : memref<25x8x256xf32, #tpu.memory_space<vmem>>, vector<1x8x256xf32>
    %3 = vector.shape_cast %2 : vector<1x8x256xf32> to vector<8x256xf32>
    %4 = arith.mulf %1, %3 : vector<8x256xf32>
    %c0_5 = arith.constant 0 : index
    %c0_6 = arith.constant 0 : index
    %5 = vector.load %arg2[%c0_5, %c0_6] : memref<8x256xf32, #tpu.memory_space<vmem>>, vector<8x256xf32>
    %6 = arith.addf %4, %5 : vector<8x256xf32>
    %c1 = arith.constant 1 : index
    %c0_7 = arith.constant 0 : index
    %c0_8 = arith.constant 0 : index
    %7 = vector.load %arg0[%c1, %c0_7, %c0_8] : memref<25x8x256xf32, #tpu.memory_space<vmem>>, vector<1x8x256xf32>
    %8 = vector.shape_cast %7 : vector<1x8x256xf32> to vector<8x256xf32>
    %c1_9 = arith.constant 1 : index
    %c0_10 = arith.constant 0 : index
    %c0_11 = arith.constant 0 : index
    %9 = vector.load %arg1[%c1_9, %c0_10, %c0_11] : memref<25x8x256xf32, #tpu.memory_space<vmem>>, vector<1x8x256xf32>
    %10 = vector.shape_cast %9 : vector<1x8x256xf32> to vector<8x256xf32>
    %11 = arith.mulf %8, %10 : vector<8x256xf32>
    %12 = arith.addf %6, %11 : vector<8x256xf32>
    %c2 = arith.constant 2 : index
    %c0_12 = arith.constant 0 : index
    %c0_13 = arith.constant 0 : index
    %13 = vector.load %arg0[%c2, %c0_12, %c0_13] : memref<25x8x256xf32, #tpu.memory_space<vmem>>, vector<1x8x256xf32>
    %14 = vector.shape_cast %13 : vector<1x8x256xf32> to vector<8x256xf32>
    %c2_14 = arith.constant 2 : index
    %c0_15 = arith.constant 0 : index
    %c0_16 = arith.constant 0 : index
    %15 = vector.load %arg1[%c2_14, %c0_15, %c0_16] : memref<25x8x256xf32, #tpu.memory_space<vmem>>, vector<1x8x256xf32>
    %16 = vector.shape_cast %15 : vector<1x8x256xf32> to vector<8x256xf32>
    %17 = arith.mulf %14, %16 : vector<8x256xf32>
    %18 = arith.addf %12, %17 : vector<8x256xf32>
    %c3 = arith.constant 3 : index
    %c0_17 = arith.constant 0 : index
    %c0_18 = arith.constant 0 : index
    %19 = vector.load %arg0[%c3, %c0_17, %c0_18] : memref<25x8x256xf32, #tpu.memory_space<vmem>>, vector<1x8x256xf32>
    %20 = vector.shape_cast %19 : vector<1x8x256xf32> to vector<8x256xf32>
    %c3_19 = arith.constant 3 : index
    %c0_20 = arith.constant 0 : index
    %c0_21 = arith.constant 0 : index
    %21 = vector.load %arg1[%c3_19, %c0_20, %c0_21] : memref<25x8x256xf32, #tpu.memory_space<vmem>>, vector<1x8x256xf32>
    %22 = vector.shape_cast %21 : vector<1x8x256xf32> to vector<8x256xf32>
    %23 = arith.mulf %20, %22 : vector<8x256xf32>
    %24 = arith.addf %18, %23 : vector<8x256xf32>
    %c4 = arith.constant 4 : index
    %c0_22 = arith.constant 0 : index
    %c0_23 = arith.constant 0 : index
    %25 = vector.load %arg0[%c4, %c0_22, %c0_23] : memref<25x8x256xf32, #tpu.memory_space<vmem>>, vector<1x8x256xf32>
    %26 = vector.shape_cast %25 : vector<1x8x256xf32> to vector<8x256xf32>
    %c4_24 = arith.constant 4 : index
    %c0_25 = arith.constant 0 : index
    %c0_26 = arith.constant 0 : index
    %27 = vector.load %arg1[%c4_24, %c0_25, %c0_26] : memref<25x8x256xf32, #tpu.memory_space<vmem>>, vector<1x8x256xf32>
    %28 = vector.shape_cast %27 : vector<1x8x256xf32> to vector<8x256xf32>
    %29 = arith.mulf %26, %28 : vector<8x256xf32>
    %30 = arith.addf %24, %29 : vector<8x256xf32>
    %c5 = arith.constant 5 : index
    %c0_27 = arith.constant 0 : index
    %c0_28 = arith.constant 0 : index
    %31 = vector.load %arg0[%c5, %c0_27, %c0_28] : memref<25x8x256xf32, #tpu.memory_space<vmem>>, vector<1x8x256xf32>
    %32 = vector.shape_cast %31 : vector<1x8x256xf32> to vector<8x256xf32>
    %c5_29 = arith.constant 5 : index
    %c0_30 = arith.constant 0 : index
    %c0_31 = arith.constant 0 : index
    %33 = vector.load %arg1[%c5_29, %c0_30, %c0_31] : memref<25x8x256xf32, #tpu.memory_space<vmem>>, vector<1x8x256xf32>
    %34 = vector.shape_cast %33 : vector<1x8x256xf32> to vector<8x256xf32>
    %35 = arith.mulf %32, %34 : vector<8x256xf32>
    %36 = arith.addf %30, %35 : vector<8x256xf32>
    %c6 = arith.constant 6 : index
    %c0_32 = arith.constant 0 : index
    %c0_33 = arith.constant 0 : index
    %37 = vector.load %arg0[%c6, %c0_32, %c0_33] : memref<25x8x256xf32, #tpu.memory_space<vmem>>, vector<1x8x256xf32>
    %38 = vector.shape_cast %37 : vector<1x8x256xf32> to vector<8x256xf32>
    %c6_34 = arith.constant 6 : index
    %c0_35 = arith.constant 0 : index
    %c0_36 = arith.constant 0 : index
    %39 = vector.load %arg1[%c6_34, %c0_35, %c0_36] : memref<25x8x256xf32, #tpu.memory_space<vmem>>, vector<1x8x256xf32>
    %40 = vector.shape_cast %39 : vector<1x8x256xf32> to vector<8x256xf32>
    %41 = arith.mulf %38, %40 : vector<8x256xf32>
    %42 = arith.addf %36, %41 : vector<8x256xf32>
    %c7 = arith.constant 7 : index
    %c0_37 = arith.constant 0 : index
    %c0_38 = arith.constant 0 : index
    %43 = vector.load %arg0[%c7, %c0_37, %c0_38] : memref<25x8x256xf32, #tpu.memory_space<vmem>>, vector<1x8x256xf32>
    %44 = vector.shape_cast %43 : vector<1x8x256xf32> to vector<8x256xf32>
    %c7_39 = arith.constant 7 : index
    %c0_40 = arith.constant 0 : index
    %c0_41 = arith.constant 0 : index
    %45 = vector.load %arg1[%c7_39, %c0_40, %c0_41] : memref<25x8x256xf32, #tpu.memory_space<vmem>>, vector<1x8x256xf32>
    %46 = vector.shape_cast %45 : vector<1x8x256xf32> to vector<8x256xf32>
    %47 = arith.mulf %44, %46 : vector<8x256xf32>
    %48 = arith.addf %42, %47 : vector<8x256xf32>
    %c8 = arith.constant 8 : index
    %c0_42 = arith.constant 0 : index
    %c0_43 = arith.constant 0 : index
    %49 = vector.load %arg0[%c8, %c0_42, %c0_43] : memref<25x8x256xf32, #tpu.memory_space<vmem>>, vector<1x8x256xf32>
    %50 = vector.shape_cast %49 : vector<1x8x256xf32> to vector<8x256xf32>
    %c8_44 = arith.constant 8 : index
    %c0_45 = arith.constant 0 : index
    %c0_46 = arith.constant 0 : index
    %51 = vector.load %arg1[%c8_44, %c0_45, %c0_46] : memref<25x8x256xf32, #tpu.memory_space<vmem>>, vector<1x8x256xf32>
    %52 = vector.shape_cast %51 : vector<1x8x256xf32> to vector<8x256xf32>
    %53 = arith.mulf %50, %52 : vector<8x256xf32>
    %54 = arith.addf %48, %53 : vector<8x256xf32>
    %c9 = arith.constant 9 : index
    %c0_47 = arith.constant 0 : index
    %c0_48 = arith.constant 0 : index
    %55 = vector.load %arg0[%c9, %c0_47, %c0_48] : memref<25x8x256xf32, #tpu.memory_space<vmem>>, vector<1x8x256xf32>
    %56 = vector.shape_cast %55 : vector<1x8x256xf32> to vector<8x256xf32>
    %c9_49 = arith.constant 9 : index
    %c0_50 = arith.constant 0 : index
    %c0_51 = arith.constant 0 : index
    %57 = vector.load %arg1[%c9_49, %c0_50, %c0_51] : memref<25x8x256xf32, #tpu.memory_space<vmem>>, vector<1x8x256xf32>
    %58 = vector.shape_cast %57 : vector<1x8x256xf32> to vector<8x256xf32>
    %59 = arith.mulf %56, %58 : vector<8x256xf32>
    %60 = arith.addf %54, %59 : vector<8x256xf32>
    %c10 = arith.constant 10 : index
    %c0_52 = arith.constant 0 : index
    %c0_53 = arith.constant 0 : index
    %61 = vector.load %arg0[%c10, %c0_52, %c0_53] : memref<25x8x256xf32, #tpu.memory_space<vmem>>, vector<1x8x256xf32>
    %62 = vector.shape_cast %61 : vector<1x8x256xf32> to vector<8x256xf32>
    %c10_54 = arith.constant 10 : index
    %c0_55 = arith.constant 0 : index
    %c0_56 = arith.constant 0 : index
    %63 = vector.load %arg1[%c10_54, %c0_55, %c0_56] : memref<25x8x256xf32, #tpu.memory_space<vmem>>, vector<1x8x256xf32>
    %64 = vector.shape_cast %63 : vector<1x8x256xf32> to vector<8x256xf32>
    %65 = arith.mulf %62, %64 : vector<8x256xf32>
    %66 = arith.addf %60, %65 : vector<8x256xf32>
    %c11 = arith.constant 11 : index
    %c0_57 = arith.constant 0 : index
    %c0_58 = arith.constant 0 : index
    %67 = vector.load %arg0[%c11, %c0_57, %c0_58] : memref<25x8x256xf32, #tpu.memory_space<vmem>>, vector<1x8x256xf32>
    %68 = vector.shape_cast %67 : vector<1x8x256xf32> to vector<8x256xf32>
    %c11_59 = arith.constant 11 : index
    %c0_60 = arith.constant 0 : index
    %c0_61 = arith.constant 0 : index
    %69 = vector.load %arg1[%c11_59, %c0_60, %c0_61] : memref<25x8x256xf32, #tpu.memory_space<vmem>>, vector<1x8x256xf32>
    %70 = vector.shape_cast %69 : vector<1x8x256xf32> to vector<8x256xf32>
    %71 = arith.mulf %68, %70 : vector<8x256xf32>
    %72 = arith.addf %66, %71 : vector<8x256xf32>
    %c12 = arith.constant 12 : index
    %c0_62 = arith.constant 0 : index
    %c0_63 = arith.constant 0 : index
    %73 = vector.load %arg0[%c12, %c0_62, %c0_63] : memref<25x8x256xf32, #tpu.memory_space<vmem>>, vector<1x8x256xf32>
    %74 = vector.shape_cast %73 : vector<1x8x256xf32> to vector<8x256xf32>
    %c12_64 = arith.constant 12 : index
    %c0_65 = arith.constant 0 : index
    %c0_66 = arith.constant 0 : index
    %75 = vector.load %arg1[%c12_64, %c0_65, %c0_66] : memref<25x8x256xf32, #tpu.memory_space<vmem>>, vector<1x8x256xf32>
    %76 = vector.shape_cast %75 : vector<1x8x256xf32> to vector<8x256xf32>
    %77 = arith.mulf %74, %76 : vector<8x256xf32>
    %78 = arith.addf %72, %77 : vector<8x256xf32>
    %c13 = arith.constant 13 : index
    %c0_67 = arith.constant 0 : index
    %c0_68 = arith.constant 0 : index
    %79 = vector.load %arg0[%c13, %c0_67, %c0_68] : memref<25x8x256xf32, #tpu.memory_space<vmem>>, vector<1x8x256xf32>
    %80 = vector.shape_cast %79 : vector<1x8x256xf32> to vector<8x256xf32>
    %c13_69 = arith.constant 13 : index
    %c0_70 = arith.constant 0 : index
    %c0_71 = arith.constant 0 : index
    %81 = vector.load %arg1[%c13_69, %c0_70, %c0_71] : memref<25x8x256xf32, #tpu.memory_space<vmem>>, vector<1x8x256xf32>
    %82 = vector.shape_cast %81 : vector<1x8x256xf32> to vector<8x256xf32>
    %83 = arith.mulf %80, %82 : vector<8x256xf32>
    %84 = arith.addf %78, %83 : vector<8x256xf32>
    %c14 = arith.constant 14 : index
    %c0_72 = arith.constant 0 : index
    %c0_73 = arith.constant 0 : index
    %85 = vector.load %arg0[%c14, %c0_72, %c0_73] : memref<25x8x256xf32, #tpu.memory_space<vmem>>, vector<1x8x256xf32>
    %86 = vector.shape_cast %85 : vector<1x8x256xf32> to vector<8x256xf32>
    %c14_74 = arith.constant 14 : index
    %c0_75 = arith.constant 0 : index
    %c0_76 = arith.constant 0 : index
    %87 = vector.load %arg1[%c14_74, %c0_75, %c0_76] : memref<25x8x256xf32, #tpu.memory_space<vmem>>, vector<1x8x256xf32>
    %88 = vector.shape_cast %87 : vector<1x8x256xf32> to vector<8x256xf32>
    %89 = arith.mulf %86, %88 : vector<8x256xf32>
    %90 = arith.addf %84, %89 : vector<8x256xf32>
    %c15 = arith.constant 15 : index
    %c0_77 = arith.constant 0 : index
    %c0_78 = arith.constant 0 : index
    %91 = vector.load %arg0[%c15, %c0_77, %c0_78] : memref<25x8x256xf32, #tpu.memory_space<vmem>>, vector<1x8x256xf32>
    %92 = vector.shape_cast %91 : vector<1x8x256xf32> to vector<8x256xf32>
    %c15_79 = arith.constant 15 : index
    %c0_80 = arith.constant 0 : index
    %c0_81 = arith.constant 0 : index
    %93 = vector.load %arg1[%c15_79, %c0_80, %c0_81] : memref<25x8x256xf32, #tpu.memory_space<vmem>>, vector<1x8x256xf32>
    %94 = vector.shape_cast %93 : vector<1x8x256xf32> to vector<8x256xf32>
    %95 = arith.mulf %92, %94 : vector<8x256xf32>
    %96 = arith.addf %90, %95 : vector<8x256xf32>
    %c16 = arith.constant 16 : index
    %c0_82 = arith.constant 0 : index
    %c0_83 = arith.constant 0 : index
    %97 = vector.load %arg0[%c16, %c0_82, %c0_83] : memref<25x8x256xf32, #tpu.memory_space<vmem>>, vector<1x8x256xf32>
    %98 = vector.shape_cast %97 : vector<1x8x256xf32> to vector<8x256xf32>
    %c16_84 = arith.constant 16 : index
    %c0_85 = arith.constant 0 : index
    %c0_86 = arith.constant 0 : index
    %99 = vector.load %arg1[%c16_84, %c0_85, %c0_86] : memref<25x8x256xf32, #tpu.memory_space<vmem>>, vector<1x8x256xf32>
    %100 = vector.shape_cast %99 : vector<1x8x256xf32> to vector<8x256xf32>
    %101 = arith.mulf %98, %100 : vector<8x256xf32>
    %102 = arith.addf %96, %101 : vector<8x256xf32>
    %c17 = arith.constant 17 : index
    %c0_87 = arith.constant 0 : index
    %c0_88 = arith.constant 0 : index
    %103 = vector.load %arg0[%c17, %c0_87, %c0_88] : memref<25x8x256xf32, #tpu.memory_space<vmem>>, vector<1x8x256xf32>
    %104 = vector.shape_cast %103 : vector<1x8x256xf32> to vector<8x256xf32>
    %c17_89 = arith.constant 17 : index
    %c0_90 = arith.constant 0 : index
    %c0_91 = arith.constant 0 : index
    %105 = vector.load %arg1[%c17_89, %c0_90, %c0_91] : memref<25x8x256xf32, #tpu.memory_space<vmem>>, vector<1x8x256xf32>
    %106 = vector.shape_cast %105 : vector<1x8x256xf32> to vector<8x256xf32>
    %107 = arith.mulf %104, %106 : vector<8x256xf32>
    %108 = arith.addf %102, %107 : vector<8x256xf32>
    %c18 = arith.constant 18 : index
    %c0_92 = arith.constant 0 : index
    %c0_93 = arith.constant 0 : index
    %109 = vector.load %arg0[%c18, %c0_92, %c0_93] : memref<25x8x256xf32, #tpu.memory_space<vmem>>, vector<1x8x256xf32>
    %110 = vector.shape_cast %109 : vector<1x8x256xf32> to vector<8x256xf32>
    %c18_94 = arith.constant 18 : index
    %c0_95 = arith.constant 0 : index
    %c0_96 = arith.constant 0 : index
    %111 = vector.load %arg1[%c18_94, %c0_95, %c0_96] : memref<25x8x256xf32, #tpu.memory_space<vmem>>, vector<1x8x256xf32>
    %112 = vector.shape_cast %111 : vector<1x8x256xf32> to vector<8x256xf32>
    %113 = arith.mulf %110, %112 : vector<8x256xf32>
    %114 = arith.addf %108, %113 : vector<8x256xf32>
    %c19 = arith.constant 19 : index
    %c0_97 = arith.constant 0 : index
    %c0_98 = arith.constant 0 : index
    %115 = vector.load %arg0[%c19, %c0_97, %c0_98] : memref<25x8x256xf32, #tpu.memory_space<vmem>>, vector<1x8x256xf32>
    %116 = vector.shape_cast %115 : vector<1x8x256xf32> to vector<8x256xf32>
    %c19_99 = arith.constant 19 : index
    %c0_100 = arith.constant 0 : index
    %c0_101 = arith.constant 0 : index
    %117 = vector.load %arg1[%c19_99, %c0_100, %c0_101] : memref<25x8x256xf32, #tpu.memory_space<vmem>>, vector<1x8x256xf32>
    %118 = vector.shape_cast %117 : vector<1x8x256xf32> to vector<8x256xf32>
    %119 = arith.mulf %116, %118 : vector<8x256xf32>
    %120 = arith.addf %114, %119 : vector<8x256xf32>
    %c20 = arith.constant 20 : index
    %c0_102 = arith.constant 0 : index
    %c0_103 = arith.constant 0 : index
    %121 = vector.load %arg0[%c20, %c0_102, %c0_103] : memref<25x8x256xf32, #tpu.memory_space<vmem>>, vector<1x8x256xf32>
    %122 = vector.shape_cast %121 : vector<1x8x256xf32> to vector<8x256xf32>
    %c20_104 = arith.constant 20 : index
    %c0_105 = arith.constant 0 : index
    %c0_106 = arith.constant 0 : index
    %123 = vector.load %arg1[%c20_104, %c0_105, %c0_106] : memref<25x8x256xf32, #tpu.memory_space<vmem>>, vector<1x8x256xf32>
    %124 = vector.shape_cast %123 : vector<1x8x256xf32> to vector<8x256xf32>
    %125 = arith.mulf %122, %124 : vector<8x256xf32>
    %126 = arith.addf %120, %125 : vector<8x256xf32>
    %c21 = arith.constant 21 : index
    %c0_107 = arith.constant 0 : index
    %c0_108 = arith.constant 0 : index
    %127 = vector.load %arg0[%c21, %c0_107, %c0_108] : memref<25x8x256xf32, #tpu.memory_space<vmem>>, vector<1x8x256xf32>
    %128 = vector.shape_cast %127 : vector<1x8x256xf32> to vector<8x256xf32>
    %c21_109 = arith.constant 21 : index
    %c0_110 = arith.constant 0 : index
    %c0_111 = arith.constant 0 : index
    %129 = vector.load %arg1[%c21_109, %c0_110, %c0_111] : memref<25x8x256xf32, #tpu.memory_space<vmem>>, vector<1x8x256xf32>
    %130 = vector.shape_cast %129 : vector<1x8x256xf32> to vector<8x256xf32>
    %131 = arith.mulf %128, %130 : vector<8x256xf32>
    %132 = arith.addf %126, %131 : vector<8x256xf32>
    %c22 = arith.constant 22 : index
    %c0_112 = arith.constant 0 : index
    %c0_113 = arith.constant 0 : index
    %133 = vector.load %arg0[%c22, %c0_112, %c0_113] : memref<25x8x256xf32, #tpu.memory_space<vmem>>, vector<1x8x256xf32>
    %134 = vector.shape_cast %133 : vector<1x8x256xf32> to vector<8x256xf32>
    %c22_114 = arith.constant 22 : index
    %c0_115 = arith.constant 0 : index
    %c0_116 = arith.constant 0 : index
    %135 = vector.load %arg1[%c22_114, %c0_115, %c0_116] : memref<25x8x256xf32, #tpu.memory_space<vmem>>, vector<1x8x256xf32>
    %136 = vector.shape_cast %135 : vector<1x8x256xf32> to vector<8x256xf32>
    %137 = arith.mulf %134, %136 : vector<8x256xf32>
    %138 = arith.addf %132, %137 : vector<8x256xf32>
    %c23 = arith.constant 23 : index
    %c0_117 = arith.constant 0 : index
    %c0_118 = arith.constant 0 : index
    %139 = vector.load %arg0[%c23, %c0_117, %c0_118] : memref<25x8x256xf32, #tpu.memory_space<vmem>>, vector<1x8x256xf32>
    %140 = vector.shape_cast %139 : vector<1x8x256xf32> to vector<8x256xf32>
    %c23_119 = arith.constant 23 : index
    %c0_120 = arith.constant 0 : index
    %c0_121 = arith.constant 0 : index
    %141 = vector.load %arg1[%c23_119, %c0_120, %c0_121] : memref<25x8x256xf32, #tpu.memory_space<vmem>>, vector<1x8x256xf32>
    %142 = vector.shape_cast %141 : vector<1x8x256xf32> to vector<8x256xf32>
    %143 = arith.mulf %140, %142 : vector<8x256xf32>
    %144 = arith.addf %138, %143 : vector<8x256xf32>
    %c24 = arith.constant 24 : index
    %c0_122 = arith.constant 0 : index
    %c0_123 = arith.constant 0 : index
    %145 = vector.load %arg0[%c24, %c0_122, %c0_123] : memref<25x8x256xf32, #tpu.memory_space<vmem>>, vector<1x8x256xf32>
    %146 = vector.shape_cast %145 : vector<1x8x256xf32> to vector<8x256xf32>
    %c24_124 = arith.constant 24 : index
    %c0_125 = arith.constant 0 : index
    %c0_126 = arith.constant 0 : index
    %147 = vector.load %arg1[%c24_124, %c0_125, %c0_126] : memref<25x8x256xf32, #tpu.memory_space<vmem>>, vector<1x8x256xf32>
    %148 = vector.shape_cast %147 : vector<1x8x256xf32> to vector<8x256xf32>
    %149 = arith.mulf %146, %148 : vector<8x256xf32>
    %150 = arith.addf %144, %149 : vector<8x256xf32>
    %c0_127 = arith.constant 0 : index
    %c0_128 = arith.constant 0 : index
    %151 = vector.load %arg3[%c0_127, %c0_128] : memref<8x256xf32, #tpu.memory_space<vmem>>, vector<8x256xf32>
    tpu.vector_store %arg3[%c0_127, %c0_128], %150 {strides = array<i32>} : memref<8x256xf32, #tpu.memory_space<vmem>>, vector<8x256xf32>,
    return
  }
}

</mosaic_0001>

<llo_original>
// kernel: model_forward.1
$region0: #{model_forward.1}
  #allocation0 [shape = 'u32[]', space=smem, size = 0x4, offset = 0x4, fixed_abs, tag = 'smem constant byte address 0x4 - core index']
  #allocation1 [shape = 'u32[72,128]{1,0:T(1,128)}', space=vmem, size = 0x9000, scoped, tag = 'internal scratch']
  %s0 = inlined_call_operand.vmem [shape: f32[25,8,256], index: 0, kind: input, shape index: {}]
  %s1 = inlined_call_operand.vmem [shape: f32[25,8,256], index: 1, kind: input, shape index: {}]
  %s2 = inlined_call_operand.vmem [shape: f32[8,256], index: 2, kind: input, shape index: {}]
  %s3 = inlined_call_operand.vmem [shape: f32[8,256], index: 3, kind: output, shape index: {}]
  %s4 = sld [smem:[#allocation0]]
  $region22: #{model_forward.1} parent=0
    _
  %s6 = ssub.s32 1, %s4
  %s7 = scalar_select 0, %s6, %s4
  // Predicated region
  $region2: #{model_forward.1} parent=0 // pred_check
    _
  $region3: #{model_forward.1} parent=0 // pred_check_branch
    %9 = sbr.rel (0) target = $region5
  $region4: #{model_forward.1} parent=0 // pred_region
    _
  $region5: #{model_forward.1} parent=0 // pred_fallthru
    _
  // Predicated region
  $region6: #{model_forward.1} parent=0 // pred_check
    _
  $region7: #{model_forward.1} parent=0 // pred_check_branch
    %11 = sbr.rel (0) target = $region9
  $region8: #{model_forward.1} parent=0 // pred_region
    _
  $region9: #{model_forward.1} parent=0 // pred_fallthru
    _
  // Predicated region
  $region10: #{model_forward.1} parent=0 // pred_check
    _
  $region11: #{model_forward.1} parent=0 // pred_check_branch
    %13 = sbr.rel (0) target = $region13
  $region12: #{model_forward.1} parent=0 // pred_region
    _
  $region13: #{model_forward.1} parent=0 // pred_fallthru
    _
  %v14 = vld [vmem:[%s0] sm:$0xff]
  %v15 = vld [vmem:[%s0 + $0x8] sm:$0xff]
  %v16 = vld [vmem:[%s1] sm:$0xff]
  %v17 = vld [vmem:[%s1 + $0x8] sm:$0xff]
  %v18 = vmul.f32 %v14, %v16
  %v19 = vmul.f32 %v15, %v17
  %v20 = vld [vmem:[%s2] sm:$0xff]
  %v21 = vld [vmem:[%s2 + $0x8] sm:$0xff]
  %v22 = vadd.f32 %v18, %v20
  %v23 = vadd.f32 %v19, %v21
  %s24 = scalar_lea.vmem %s0, 16
  %v25 = vld [vmem:[%s24] sm:$0xff]
  %v26 = vld [vmem:[%s24 + $0x8] sm:$0xff]
  %s27 = scalar_lea.vmem %s1, 16
  %v28 = vld [vmem:[%s27] sm:$0xff]
  %v29 = vld [vmem:[%s27 + $0x8] sm:$0xff]
  %v30 = vmul.f32 %v25, %v28
  %v31 = vmul.f32 %v26, %v29
  %v32 = vadd.f32 %v22, %v30
  %v33 = vadd.f32 %v23, %v31
  %s34 = scalar_lea.vmem %s0, 32
  %v35 = vld [vmem:[%s34] sm:$0xff]
  %v36 = vld [vmem:[%s34 + $0x8] sm:$0xff]
  %s37 = scalar_lea.vmem %s1, 32
  %v38 = vld [vmem:[%s37] sm:$0xff]
  %v39 = vld [vmem:[%s37 + $0x8] sm:$0xff]
  %v40 = vmul.f32 %v35, %v38
  %v41 = vmul.f32 %v36, %v39
  %v42 = vadd.f32 %v32, %v40
  %v43 = vadd.f32 %v33, %v41
  %s44 = scalar_lea.vmem %s0, 48
  %v45 = vld [vmem:[%s44] sm:$0xff]
  %v46 = vld [vmem:[%s44 + $0x8] sm:$0xff]
  %s47 = scalar_lea.vmem %s1, 48
  %v48 = vld [vmem:[%s47] sm:$0xff]
  %v49 = vld [vmem:[%s47 + $0x8] sm:$0xff]
  %v50 = vmul.f32 %v45, %v48
  %v51 = vmul.f32 %v46, %v49
  %v52 = vadd.f32 %v42, %v50
  %v53 = vadd.f32 %v43, %v51
  %s54 = scalar_lea.vmem %s0, 64
  %v55 = vld [vmem:[%s54] sm:$0xff]
  %v56 = vld [vmem:[%s54 + $0x8] sm:$0xff]
  %s57 = scalar_lea.vmem %s1, 64
  %v58 = vld [vmem:[%s57] sm:$0xff]
  %v59 = vld [vmem:[%s57 + $0x8] sm:$0xff]
  %v60 = vmul.f32 %v55, %v58
  %v61 = vmul.f32 %v56, %v59
  %v62 = vadd.f32 %v52, %v60
  %v63 = vadd.f32 %v53, %v61
  %s64 = scalar_lea.vmem %s0, 80
  %v65 = vld [vmem:[%s64] sm:$0xff]
  %v66 = vld [vmem:[%s64 + $0x8] sm:$0xff]
  %s67 = scalar_lea.vmem %s1, 80
  %v68 = vld [vmem:[%s67] sm:$0xff]
  %v69 = vld [vmem:[%s67 + $0x8] sm:$0xff]
  %v70 = vmul.f32 %v65, %v68
  %v71 = vmul.f32 %v66, %v69
  %v72 = vadd.f32 %v62, %v70
  %v73 = vadd.f32 %v63, %v71
  %s74 = scalar_lea.vmem %s0, 96
  %v75 = vld [vmem:[%s74] sm:$0xff]
  %v76 = vld [vmem:[%s74 + $0x8] sm:$0xff]
  %s77 = scalar_lea.vmem %s1, 96
  %v78 = vld [vmem:[%s77] sm:$0xff]
  %v79 = vld [vmem:[%s77 + $0x8] sm:$0xff]
  %v80 = vmul.f32 %v75, %v78
  %v81 = vmul.f32 %v76, %v79
  %v82 = vadd.f32 %v72, %v80
  %v83 = vadd.f32 %v73, %v81
  %s84 = scalar_lea.vmem %s0, 112
  %v85 = vld [vmem:[%s84] sm:$0xff]
  %v86 = vld [vmem:[%s84 + $0x8] sm:$0xff]
  %s87 = scalar_lea.vmem %s1, 112
  %v88 = vld [vmem:[%s87] sm:$0xff]
  %v89 = vld [vmem:[%s87 + $0x8] sm:$0xff]
  %v90 = vmul.f32 %v85, %v88
  %v91 = vmul.f32 %v86, %v89
  %v92 = vadd.f32 %v82, %v90
  %v93 = vadd.f32 %v83, %v91
  %s94 = scalar_lea.vmem %s0, 128
  %v95 = vld [vmem:[%s94] sm:$0xff]
  %v96 = vld [vmem:[%s94 + $0x8] sm:$0xff]
  %s97 = scalar_lea.vmem %s1, 128
  %v98 = vld [vmem:[%s97] sm:$0xff]
  %v99 = vld [vmem:[%s97 + $0x8] sm:$0xff]
  %v100 = vmul.f32 %v95, %v98
  %v101 = vmul.f32 %v96, %v99
  %v102 = vadd.f32 %v92, %v100
  %v103 = vadd.f32 %v93, %v101
  %s104 = scalar_lea.vmem %s0, 144
  %v105 = vld [vmem:[%s104] sm:$0xff]
  %v106 = vld [vmem:[%s104 + $0x8] sm:$0xff]
  %s107 = scalar_lea.vmem %s1, 144
  %v108 = vld [vmem:[%s107] sm:$0xff]
  %v109 = vld [vmem:[%s107 + $0x8] sm:$0xff]
  %v110 = vmul.f32 %v105, %v108
  %v111 = vmul.f32 %v106, %v109
  %v112 = vadd.f32 %v102, %v110
  %v113 = vadd.f32 %v103, %v111
  %s114 = scalar_lea.vmem %s0, 160
  %v115 = vld [vmem:[%s114] sm:$0xff]
  %v116 = vld [vmem:[%s114 + $0x8] sm:$0xff]
  %s117 = scalar_lea.vmem %s1, 160
  %v118 = vld [vmem:[%s117] sm:$0xff]
  %v119 = vld [vmem:[%s117 + $0x8] sm:$0xff]
  %v120 = vmul.f32 %v115, %v118
  %v121 = vmul.f32 %v116, %v119
  %v122 = vadd.f32 %v112, %v120
  %v123 = vadd.f32 %v113, %v121
  %s124 = scalar_lea.vmem %s0, 176
  %v125 = vld [vmem:[%s124] sm:$0xff]
  %v126 = vld [vmem:[%s124 + $0x8] sm:$0xff]
  %s127 = scalar_lea.vmem %s1, 176
  %v128 = vld [vmem:[%s127] sm:$0xff]
  %v129 = vld [vmem:[%s127 + $0x8] sm:$0xff]
  %v130 = vmul.f32 %v125, %v128
  %v131 = vmul.f32 %v126, %v129
  %v132 = vadd.f32 %v122, %v130
  %v133 = vadd.f32 %v123, %v131
  %s134 = scalar_lea.vmem %s0, 192
  %v135 = vld [vmem:[%s134] sm:$0xff]
  %v136 = vld [vmem:[%s134 + $0x8] sm:$0xff]
  %s137 = scalar_lea.vmem %s1, 192
  %v138 = vld [vmem:[%s137] sm:$0xff]
  %v139 = vld [vmem:[%s137 + $0x8] sm:$0xff]
  %v140 = vmul.f32 %v135, %v138
  %v141 = vmul.f32 %v136, %v139
  %v142 = vadd.f32 %v132, %v140
  %v143 = vadd.f32 %v133, %v141
  %s144 = scalar_lea.vmem %s0, 208
  %v145 = vld [vmem:[%s144] sm:$0xff]
  %v146 = vld [vmem:[%s144 + $0x8] sm:$0xff]
  %s147 = scalar_lea.vmem %s1, 208
  %v148 = vld [vmem:[%s147] sm:$0xff]
  %v149 = vld [vmem:[%s147 + $0x8] sm:$0xff]
  %v150 = vmul.f32 %v145, %v148
  %v151 = vmul.f32 %v146, %v149
  %v152 = vadd.f32 %v142, %v150
  %v153 = vadd.f32 %v143, %v151
  %s154 = scalar_lea.vmem %s0, 224
  %v155 = vld [vmem:[%s154] sm:$0xff]
  %v156 = vld [vmem:[%s154 + $0x8] sm:$0xff]
  %s157 = scalar_lea.vmem %s1, 224
  %v158 = vld [vmem:[%s157] sm:$0xff]
  %v159 = vld [vmem:[%s157 + $0x8] sm:$0xff]
  %v160 = vmul.f32 %v155, %v158
  %v161 = vmul.f32 %v156, %v159
  %v162 = vadd.f32 %v152, %v160
  %v163 = vadd.f32 %v153, %v161
  %s164 = scalar_lea.vmem %s0, 240
  %v165 = vld [vmem:[%s164] sm:$0xff]
  %v166 = vld [vmem:[%s164 + $0x8] sm:$0xff]
  %s167 = scalar_lea.vmem %s1, 240
  %v168 = vld [vmem:[%s167] sm:$0xff]
  %v169 = vld [vmem:[%s167 + $0x8] sm:$0xff]
  %v170 = vmul.f32 %v165, %v168
  %v171 = vmul.f32 %v166, %v169
  %v172 = vadd.f32 %v162, %v170
  %v173 = vadd.f32 %v163, %v171
  %s174 = scalar_lea.vmem %s0, 256
  %v175 = vld [vmem:[%s174] sm:$0xff]
  %v176 = vld [vmem:[%s174 + $0x8] sm:$0xff]
  %s177 = scalar_lea.vmem %s1, 256
  %v178 = vld [vmem:[%s177] sm:$0xff]
  %v179 = vld [vmem:[%s177 + $0x8] sm:$0xff]
  %v180 = vmul.f32 %v175, %v178
  %v181 = vmul.f32 %v176, %v179
  %v182 = vadd.f32 %v172, %v180
  %v183 = vadd.f32 %v173, %v181
  %s184 = scalar_lea.vmem %s0, 272
  %v185 = vld [vmem:[%s184] sm:$0xff]
  %v186 = vld [vmem:[%s184 + $0x8] sm:$0xff]
  %s187 = scalar_lea.vmem %s1, 272
  %v188 = vld [vmem:[%s187] sm:$0xff]
  %v189 = vld [vmem:[%s187 + $0x8] sm:$0xff]
  %v190 = vmul.f32 %v185, %v188
  %v191 = vmul.f32 %v186, %v189
  %v192 = vadd.f32 %v182, %v190
  %v193 = vadd.f32 %v183, %v191
  %s194 = scalar_lea.vmem %s0, 288
  %v195 = vld [vmem:[%s194] sm:$0xff]
  %v196 = vld [vmem:[%s194 + $0x8] sm:$0xff]
  %s197 = scalar_lea.vmem %s1, 288
  %v198 = vld [vmem:[%s197] sm:$0xff]
  %v199 = vld [vmem:[%s197 + $0x8] sm:$0xff]
  %v200 = vmul.f32 %v195, %v198
  %v201 = vmul.f32 %v196, %v199
  %v202 = vadd.f32 %v192, %v200
  %v203 = vadd.f32 %v193, %v201
  %s204 = scalar_lea.vmem %s0, 304
  %v205 = vld [vmem:[%s204] sm:$0xff]
  %v206 = vld [vmem:[%s204 + $0x8] sm:$0xff]
  %s207 = scalar_lea.vmem %s1, 304
  %v208 = vld [vmem:[%s207] sm:$0xff]
  %v209 = vld [vmem:[%s207 + $0x8] sm:$0xff]
  %v210 = vmul.f32 %v205, %v208
  %v211 = vmul.f32 %v206, %v209
  %v212 = vadd.f32 %v202, %v210
  %v213 = vadd.f32 %v203, %v211
  %s214 = scalar_lea.vmem %s0, 320
  %v215 = vld [vmem:[%s214] sm:$0xff]
  %v216 = vld [vmem:[%s214 + $0x8] sm:$0xff]
  %s217 = scalar_lea.vmem %s1, 320
  %v218 = vld [vmem:[%s217] sm:$0xff]
  %v219 = vld [vmem:[%s217 + $0x8] sm:$0xff]
  %v220 = vmul.f32 %v215, %v218
  %v221 = vmul.f32 %v216, %v219
  %v222 = vadd.f32 %v212, %v220
  %v223 = vadd.f32 %v213, %v221
  %s224 = scalar_lea.vmem %s0, 336
  %v225 = vld [vmem:[%s224] sm:$0xff]
  %v226 = vld [vmem:[%s224 + $0x8] sm:$0xff]
  %s227 = scalar_lea.vmem %s1, 336
  %v228 = vld [vmem:[%s227] sm:$0xff]
  %v229 = vld [vmem:[%s227 + $0x8] sm:$0xff]
  %v230 = vmul.f32 %v225, %v228
  %v231 = vmul.f32 %v226, %v229
  %v232 = vadd.f32 %v222, %v230
  %v233 = vadd.f32 %v223, %v231
  %s234 = scalar_lea.vmem %s0, 352
  %v235 = vld [vmem:[%s234] sm:$0xff]
  %v236 = vld [vmem:[%s234 + $0x8] sm:$0xff]
  %s237 = scalar_lea.vmem %s1, 352
  %v238 = vld [vmem:[%s237] sm:$0xff]
  %v239 = vld [vmem:[%s237 + $0x8] sm:$0xff]
  %v240 = vmul.f32 %v235, %v238
  %v241 = vmul.f32 %v236, %v239
  %v242 = vadd.f32 %v232, %v240
  %v243 = vadd.f32 %v233, %v241
  %s244 = scalar_lea.vmem %s0, 368
  %v245 = vld [vmem:[%s244] sm:$0xff]
  %v246 = vld [vmem:[%s244 + $0x8] sm:$0xff]
  %s247 = scalar_lea.vmem %s1, 368
  %v248 = vld [vmem:[%s247] sm:$0xff]
  %v249 = vld [vmem:[%s247 + $0x8] sm:$0xff]
  %v250 = vmul.f32 %v245, %v248
  %v251 = vmul.f32 %v246, %v249
  %v252 = vadd.f32 %v242, %v250
  %v253 = vadd.f32 %v243, %v251
  %s254 = scalar_lea.vmem %s0, 384
  %v255 = vld [vmem:[%s254] sm:$0xff]
  %v256 = vld [vmem:[%s254 + $0x8] sm:$0xff]
  %s257 = scalar_lea.vmem %s1, 384
  %v258 = vld [vmem:[%s257] sm:$0xff]
  %v259 = vld [vmem:[%s257 + $0x8] sm:$0xff]
  %v260 = vmul.f32 %v255, %v258
  %v261 = vmul.f32 %v256, %v259
  %v262 = vadd.f32 %v252, %v260
  %v263 = vadd.f32 %v253, %v261
  %264 = vst [vmem:[%s3] sm:$0xff] %v262
  %265 = vst [vmem:[%s3 + $0x8] sm:$0xff] %v263
  // Predicated region
  $region14: #{model_forward.1} parent=0 // pred_check
    _
  $region15: #{model_forward.1} parent=0 // pred_check_branch
    %267 = sbr.rel (0) target = $region17
  $region16: #{model_forward.1} parent=0 // pred_region
    _
  $region17: #{model_forward.1} parent=0 // pred_fallthru
    _
  // Predicated region
  $region18: #{model_forward.1} parent=0 // pred_check
    _
  $region19: #{model_forward.1} parent=0 // pred_check_branch
    %269 = sbr.rel (0) target = $region21
  $region20: #{model_forward.1} parent=0 // pred_region
    _
  $region21: #{model_forward.1} parent=0 // pred_fallthru
    _

</llo_original>
